<compile_context>
chip_gen: v7x
topology: tpu7x:2x2x1
jax: 0.10.0
libtpu: 0.0.40
codegen_flags: <defaults>
</compile_context>

<pallas_src>
import functools

import jax
import jax.numpy as jnp
from jax.experimental import pallas as pl
from jax.experimental.pallas import tpu as pltpu


D_IN, H1, H2, D_OUT = 32, 64, 64, 16

_NO_GRID_MAX_ROWS = 256            # below this, grid/pipeline overhead dominates
_VMEM_BUDGET = 24 * 1024 * 1024    # conservative: fits v7x (64 MiB/TC, 2 TCs resident)


# ----------------------------------------------------------------------------
# Pallas kernel: fused 3-layer MLP forward (matmuls in weight dtype, rest f32)
# ----------------------------------------------------------------------------
def mlp_kernel(x_ref, w1_ref, b1_ref, w2_ref, b2_ref, w3_ref, b3_ref, o_ref):
    w1 = w1_ref[...]
    w2 = w2_ref[...]
    w3 = w3_ref[...]
    cdt = w1.dtype                       # f32 or bf16 (MXU operand dtype)

    # In-kernel cast of x (data already in VMEM) -- no wrapper-side cast pass.
    x = x_ref[...].astype(cdt)

    # Layer 1: Linear(32 -> 64) + ReLU
    h1 = jnp.dot(x, w1, preferred_element_type=jnp.float32) + b1_ref[...]
    h1 = jnp.maximum(h1, 0.0)

    # Layer 2: Linear(64 -> 64); activation None => clamp activations to [-1000, 1000]
    h2 = jnp.dot(h1.astype(cdt), w2, preferred_element_type=jnp.float32) + b2_ref[...]
    h2 = jnp.clip(h2, -1000.0, 1000.0)

    # Layer 3: Linear(64 -> 16) + log_softmax over the 16 real classes.
    logits = jnp.dot(h2.astype(cdt), w3, preferred_element_type=jnp.float32) + b3_ref[...]
    m = jnp.max(logits, axis=-1, keepdims=True)
    shifted = logits - m
    lse = jnp.log(jnp.sum(jnp.exp(shifted), axis=-1, keepdims=True))
    o_ref[...] = (shifted - lse).astype(o_ref.dtype)


# ----------------------------------------------------------------------------
# Helpers
# ----------------------------------------------------------------------------
def _round_down(x, m):
    return (x // m) * m


def _cost(rows, out_itemsize, param_bytes):
    flops = 2 * rows * (D_IN * H1 + H1 * H2 + H2 * D_OUT)
    transcendentals = rows * (D_OUT + 1)                  # exp per class + log per row
    bytes_accessed = (rows * D_IN * 4                      # x read (f32, cast in-kernel)
                      + rows * D_OUT * out_itemsize        # 16-wide output write
                      + param_bytes)
    return pl.CostEstimate(flops=flops, transcendentals=transcendentals,
                           bytes_accessed=bytes_accessed)


def _pick_tile(batch, block_b, bytes_per_row):
    # >= 2 blocks so v7x's two TensorCores both get work ("parallel" grid axis).
    tb = min(block_b, max(8, _round_down(batch // 2, 8)))
    # Cap by a static VMEM budget (safe on v5e/v6e 128 MiB and v7x 64 MiB/TC).
    tb_cap = max(8, _round_down(_VMEM_BUDGET // bytes_per_row, 8))
    return max(8, min(tb, tb_cap))


def pack_params(w1, b1, w2, b2, w3, b3, compute_dtype=jnp.bfloat16):
    """One-time packing: matmul operands in compute dtype, biases f32.

    Weights are (in, out) (pre-transposed); biases are (1, out).
    Call once at init, reuse the tuple for every forward call.
    """
    cdt = jnp.dtype(compute_dtype)
    return (w1.astype(cdt), b1.astype(jnp.float32),
            w2.astype(cdt), b2.astype(jnp.float32),
            w3.astype(cdt), b3.astype(jnp.float32))


# ----------------------------------------------------------------------------
# pallas_call wrappers
# ----------------------------------------------------------------------------
def _call_no_grid(x, params, out_dtype):
    """Small batch: no grid, everything VMEM-resident, single kernel body."""
    rows = x.shape[0]
    param_bytes = sum(int(p.size) * p.dtype.itemsize for p in params)
    return pl.pallas_call(
        mlp_kernel,
        out_shape=jax.ShapeDtypeStruct((rows, D_OUT), out_dtype),
        in_specs=[pl.BlockSpec(memory_space=pltpu.MemorySpace.VMEM)] * 7,
        out_specs=pl.BlockSpec(memory_space=pltpu.MemorySpace.VMEM),
        cost_estimate=_cost(rows, jnp.dtype(out_dtype).itemsize, param_bytes),
    )(x, *params)


def _call_tiled(x, params, tb, n_blocks, out_dtype):
    """Batch-tiled: x/out streamed per tile; weights & biases VMEM-resident.

    x may have more rows than n_blocks * tb; only the full tiles are visited
    (the ragged tail is handled by the caller with a tiny no-grid call).
    """
    w1, b1, w2, b2, w3, b3 = params
    rows = n_blocks * tb
    out_it = jnp.dtype(out_dtype).itemsize
    param_bytes = sum(int(p.size) * p.dtype.itemsize for p in params)

    def resident(p):
        # Block index never changes -> DMA'd once, stays VMEM-resident.
        return pl.BlockSpec(p.shape, lambda i: (0, 0))

    # Explicit VMEM budget: double-buffered x/out tiles + f32 intermediates
    # + resident params, with headroom.  Keeps tile choices that fit v6e's
    # 128 MiB from blowing v7x's smaller per-core VMEM.
    vmem_need = (2 * tb * (D_IN * 4 + D_OUT * out_it)
                 + 2 * tb * (H1 + H2 + D_OUT) * 4
                 + 4 * param_bytes + (2 << 20))
    vmem_limit = int(min(max(vmem_need, 8 << 20), 30 << 20))

    return pl.pallas_call(
        mlp_kernel,
        out_shape=jax.ShapeDtypeStruct((rows, D_OUT), out_dtype),
        grid=(n_blocks,),
        in_specs=[
            pl.BlockSpec((tb, D_IN), lambda i: (i, 0)),   # streamed x tiles (f32)
            resident(w1), resident(b1),
            resident(w2), resident(b2),
            resident(w3), resident(b3),
        ],
        out_specs=pl.BlockSpec((tb, D_OUT), lambda i: (i, 0)),
        compiler_params=pltpu.CompilerParams(
            # Independent batch tiles -> shard across v7x's 2 TensorCores;
            # harmless no-op on v5e/v6e (1 TC).
            dimension_semantics=("parallel",),
            vmem_limit_bytes=vmem_limit),
        cost_estimate=_cost(rows, out_it, param_bytes),
    )(x, *params)


@functools.partial(jax.jit, static_argnames=("block_b", "out_dtype"))
def build_network_forward(x, params, *, block_b=2048, out_dtype=jnp.float32):
    """x: (B, 32) f32.  params: output of pack_params (weights (in,out), biases (1,out)).

    B <= 256 (or block_b=None): single no-grid call, all arrays in VMEM.
    Otherwise: batch-tiled grid (>= 2 blocks) over the full tiles of x, plus a
    tiny no-grid call for the ragged tail (no x padding, no wrapper-side cast).
    """
    B = x.shape[0]
    if block_b is None or B <= _NO_GRID_MAX_ROWS:
        return _call_no_grid(x, params, out_dtype)

    out_it = jnp.dtype(out_dtype).itemsize
    bytes_per_row = 2 * (D_IN * 4 + D_OUT * out_it) + 2 * (H1 + H2 + D_OUT) * 4
    tb = _pick_tile(B, block_b, bytes_per_row)
    n_blocks = B // tb
    rows_main = n_blocks * tb

    out_main = _call_tiled(x, params, tb, n_blocks, out_dtype)
    if rows_main == B:
        return out_main
    # Ragged tail: small second call instead of padding the whole x array.
    out_tail = _call_no_grid(x[rows_main:], params, out_dtype)
    return jnp.concatenate([out_main, out_tail], axis=0)


# ----------------------------------------------------------------------------
# Reference + deterministic init (mimics torch.nn.Linear default init)
# ----------------------------------------------------------------------------
def init_linear(key, fan_in, fan_out):
    kw, kb = jax.random.split(key)
    bound = 1.0 / jnp.sqrt(jnp.asarray(fan_in, jnp.float32))
    # weight stored transposed: (in, out)
    w = jax.random.uniform(kw, (fan_in, fan_out), jnp.float32, -bound, bound)
    b = jax.random.uniform(kb, (1, fan_out), jnp.float32, -bound, bound)
    return w, b


def reference_forward(x, w1, b1, w2, b2, w3, b3, compute_dtype=jnp.float32):
    cdt = jnp.dtype(compute_dtype)
    h1_ = jnp.dot(x.astype(cdt), w1.astype(cdt),
                  preferred_element_type=jnp.float32) + b1
    h1_ = jnp.maximum(h1_, 0.0)
    h2_ = jnp.dot(h1_.astype(cdt), w2.astype(cdt),
                  preferred_element_type=jnp.float32) + b2
    h2_ = jnp.clip(h2_, -1000.0, 1000.0)
    logits = jnp.dot(h2_.astype(cdt), w3.astype(cdt),
                     preferred_element_type=jnp.float32) + b3
    return jax.nn.log_softmax(logits, axis=-1)


if __name__ == "__main__":
    key = jax.random.PRNGKey(0)
    k_x, k1, k2, k3 = jax.random.split(key, 4)

    w1, b1 = init_linear(k1, D_IN, H1)
    w2, b2 = init_linear(k2, H1, H2)
    w3, b3 = init_linear(k3, H2, D_OUT)

    # The torch 'None' activation (layer 2) clamps all *parameters* to
    # [-100, 100] on every forward; with default init this is a no-op, so it
    # is applied once here (the kernel itself never mutates parameters).
    w1, b1, w2, b2, w3, b3 = (jnp.clip(p, -100.0, 100.0)
                              for p in (w1, b1, w2, b2, w3, b3))

    # --- path 1: small batch, no grid, f32 compute (exact check) -----------
    B_SMALL = 8
    x_small = jax.random.normal(k_x, (B_SMALL, D_IN), jnp.float32)
    params_f32 = pack_params(w1, b1, w2, b2, w3, b3, jnp.float32)
    out_small = build_network_forward(x_small, params_f32)
    out_small = jax.block_until_ready(out_small)
    ref_small = reference_forward(x_small, w1, b1, w2, b2, w3, b3)
    assert out_small.shape == (B_SMALL, D_OUT)
    assert jnp.allclose(out_small, ref_small, atol=1e-5, rtol=1e-5), \
        "f32 no-grid path mismatch vs reference"

    # --- path 2: batch-tiled (>=2 blocks) + ragged tail, bf16 MXU operands -
    B_BIG = 600   # > no-grid threshold and not divisible by the tile size
    x_big = jax.random.normal(jax.random.PRNGKey(1), (B_BIG, D_IN), jnp.float32)
    params_bf16 = pack_params(w1, b1, w2, b2, w3, b3, jnp.bfloat16)
    out_big = build_network_forward(x_big, params_bf16, block_b=2048)
    out_big = jax.block_until_ready(out_big)
    ref_big = reference_forward(x_big, w1, b1, w2, b2, w3, b3, jnp.bfloat16)
    assert out_big.shape == (B_BIG, D_OUT)
    # bf16 matmul operands (f32 epilogue): ~1e-2 abs error on log-probs is the
    # accepted tolerance for this path.
    assert jnp.allclose(out_big, ref_big, atol=2e-2, rtol=2e-2), \
        "bf16 tiled path mismatch vs reference"

    # TODO(synk): the torch module's NaN/Inf print-debugging and its per-forward
    # in-place clamp of parameters have no clean kernel-side equivalent
    # (host callback / parameter mutation); clamp is applied once at init.

    print("KERNEL_OK")
</pallas_src>

<mosaic_0001>
module attributes {stable_mosaic.version = 11 : i64} {
  func.func @mlp_kernel(%arg0: memref<8x32xf32, #tpu.memory_space<vmem>>, %arg1: memref<32x64xf32, #tpu.memory_space<vmem>>, %arg2: memref<1x64xf32, #tpu.memory_space<vmem>>, %arg3: memref<64x64xf32, #tpu.memory_space<vmem>>, %arg4: memref<1x64xf32, #tpu.memory_space<vmem>>, %arg5: memref<64x16xf32, #tpu.memory_space<vmem>>, %arg6: memref<1x16xf32, #tpu.memory_space<vmem>>, %arg7: memref<8x16xf32, #tpu.memory_space<vmem>>) attributes {dimension_semantics = [], scalar_prefetch = 0 : i64, scratch_operands = 0 : i64, tpu.core_type = #tpu.core_type<tc>} {
    %c0 = arith.constant 0 : index
    %c0_0 = arith.constant 0 : index
    %0 = vector.load %arg1[%c0, %c0_0] : memref<32x64xf32, #tpu.memory_space<vmem>>, vector<32x64xf32>
    %c0_1 = arith.constant 0 : index
    %c0_2 = arith.constant 0 : index
    %1 = vector.load %arg3[%c0_1, %c0_2] : memref<64x64xf32, #tpu.memory_space<vmem>>, vector<64x64xf32>
    %c0_3 = arith.constant 0 : index
    %c0_4 = arith.constant 0 : index
    %2 = vector.load %arg5[%c0_3, %c0_4] : memref<64x16xf32, #tpu.memory_space<vmem>>, vector<64x16xf32>
    %c0_5 = arith.constant 0 : index
    %c0_6 = arith.constant 0 : index
    %3 = vector.load %arg0[%c0_5, %c0_6] : memref<8x32xf32, #tpu.memory_space<vmem>>, vector<8x32xf32>
    %cst = arith.constant dense<0.000000e+00> : vector<8x64xf32>
    %4 = tpu.matmul %3, %0, %cst {dimension_numbers = #tpu.dot_dimension_numbers<[1], [0], [0], [1], [0, 0, 1, 1], [], []>} : vector<8x32xf32>, vector<32x64xf32>, vector<8x64xf32> -> vector<8x64xf32>
    %c0_7 = arith.constant 0 : index
    %c0_8 = arith.constant 0 : index
    %5 = vector.load %arg2[%c0_7, %c0_8] : memref<1x64xf32, #tpu.memory_space<vmem>>, vector<1x64xf32>
    %6 = vector.broadcast %5 : vector<1x64xf32> to vector<8x64xf32>
    %7 = arith.addf %4, %6 : vector<8x64xf32>
    %cst_9 = arith.constant 0.000000e+00 : f32
    %8 = vector.broadcast %cst_9 : f32 to vector<8x64xf32>
    %9 = arith.maximumf %7, %8 : vector<8x64xf32>
    %cst_10 = arith.constant dense<0.000000e+00> : vector<8x64xf32>
    %10 = tpu.matmul %9, %1, %cst_10 {dimension_numbers = #tpu.dot_dimension_numbers<[1], [0], [0], [1], [0, 0, 1, 1], [], []>} : vector<8x64xf32>, vector<64x64xf32>, vector<8x64xf32> -> vector<8x64xf32>
    %c0_11 = arith.constant 0 : index
    %c0_12 = arith.constant 0 : index
    %11 = vector.load %arg4[%c0_11, %c0_12] : memref<1x64xf32, #tpu.memory_space<vmem>>, vector<1x64xf32>
    %12 = vector.broadcast %11 : vector<1x64xf32> to vector<8x64xf32>
    %13 = arith.addf %10, %12 : vector<8x64xf32>
    %cst_13 = arith.constant -1.000000e+03 : f32
    %cst_14 = arith.constant 1.000000e+03 : f32
    %14 = vector.broadcast %cst_13 : f32 to vector<8x64xf32>
    %15 = arith.maximumf %14, %13 : vector<8x64xf32>
    %16 = vector.broadcast %cst_14 : f32 to vector<8x64xf32>
    %17 = arith.minimumf %16, %15 : vector<8x64xf32>
    %cst_15 = arith.constant dense<0.000000e+00> : vector<8x16xf32>
    %18 = tpu.matmul %17, %2, %cst_15 {dimension_numbers = #tpu.dot_dimension_numbers<[1], [0], [0], [1], [0, 0, 1, 1], [], []>} : vector<8x64xf32>, vector<64x16xf32>, vector<8x16xf32> -> vector<8x16xf32>
    %c0_16 = arith.constant 0 : index
    %c0_17 = arith.constant 0 : index
    %19 = vector.load %arg6[%c0_16, %c0_17] : memref<1x16xf32, #tpu.memory_space<vmem>>, vector<1x16xf32>
    %20 = vector.broadcast %19 : vector<1x16xf32> to vector<8x16xf32>
    %21 = arith.addf %18, %20 : vector<8x16xf32>
    %cst_18 = arith.constant dense<0xFF800000> : vector<8xf32>
    %22 = vector.multi_reduction <maximumf>, %21, %cst_18 [1] : vector<8x16xf32> to vector<8xf32>
    %23 = vector.shape_cast %22 : vector<8xf32> to vector<8x1xf32>
    %24 = vector.broadcast %23 : vector<8x1xf32> to vector<8x16xf32>
    %25 = arith.subf %21, %24 : vector<8x16xf32>
    %26 = math.exp %25 : vector<8x16xf32>
    %cst_19 = arith.constant dense<0.000000e+00> : vector<8xf32>
    %27 = vector.multi_reduction <add>, %26, %cst_19 [1] : vector<8x16xf32> to vector<8xf32>
    %28 = vector.shape_cast %27 : vector<8xf32> to vector<8x1xf32>
    %29 = math.log %28 : vector<8x1xf32>
    %30 = vector.broadcast %29 : vector<8x1xf32> to vector<8x16xf32>
    %31 = arith.subf %25, %30 : vector<8x16xf32>
    %c0_20 = arith.constant 0 : index
    %c0_21 = arith.constant 0 : index
    %32 = vector.load %arg7[%c0_20, %c0_21] : memref<8x16xf32, #tpu.memory_space<vmem>>, vector<8x16xf32>
    tpu.vector_store %arg7[%c0_20, %c0_21], %31 {strides = array<i32>} : memref<8x16xf32, #tpu.memory_space<vmem>>, vector<8x16xf32>,
    return
  }
}

</mosaic_0001>

<llo_original>
// kernel: build_network_forward.1
$region0: #{build_network_forward.1}
  #allocation0 [shape = 'u32[]', space=smem, size = 0x4, offset = 0x4, fixed_abs, tag = 'smem constant byte address 0x4 - core index']
  #allocation1 [shape = 'u32[144,128]{1,0:T(1,128)}', space=vmem, size = 0x12000, scoped, tag = 'internal scratch']
  %s0 = inlined_call_operand.vmem [shape: f32[8,32], index: 0, kind: input, shape index: {}]
  %s1 = inlined_call_operand.hbm [shape: f32[32,64], index: 1, kind: input, shape index: {}]
  %s2 = inlined_call_operand.vmem [shape: f32[1,64], index: 2, kind: input, shape index: {}]
  %s3 = inlined_call_operand.vmem [shape: f32[64,64], index: 3, kind: input, shape index: {}]
  %s4 = inlined_call_operand.vmem [shape: f32[1,64], index: 4, kind: input, shape index: {}]
  %s5 = inlined_call_operand.vmem [shape: f32[64,16], index: 5, kind: input, shape index: {}]
  %s6 = inlined_call_operand.vmem [shape: f32[1,16], index: 6, kind: input, shape index: {}]
  %s7 = inlined_call_operand.hbm [shape: f32[8,16], index: 7, kind: output, shape index: {}]
  %s8 = sld [smem:[#allocation0]]
  $region42: #{build_network_forward.1} parent=0
    _
  %s10 = ssub.s32 1, %s8
  %s11 = scalar_select 0, %s10, %s8
  $region1: #{build_network_forward.1} parent=0
    #allocation2 [shape = 'u8[16384]{0}', space=vmem, size = 0x4000, scoped, tag = 'input window, operand 1, single buffered']
    #allocation3 [shape = 's32[1]{0}', space=sflag, size = 0x4, scoped, tag = 'scoped memory for build_network_forward.1']
    #allocation4 [shape = 's32[1]{0}', space=sflag, size = 0x4, scoped, tag = 'scoped memory for build_network_forward.1']
    #allocation5 [shape = 'u8[4096]{0}', space=vmem, size = 0x1000, scoped, tag = 'output window, operand 0, single buffered']
    %12 = vsyncpa [#allocation3], 0
    %13 = vsyncpa [#allocation4], 0
    // Predicated region
    $region2: #{build_network_forward.1} parent=1 // pred_check
      _
    $region3: #{build_network_forward.1} parent=1 // pred_check_branch
      %15 = sbr.rel (0) target = $region5
    $region4: #{build_network_forward.1} parent=1 // pred_region
      _
    $region5: #{build_network_forward.1} parent=1 // pred_fallthru
      _
    // Predicated region
    $region6: #{build_network_forward.1} parent=1 // pred_check
      _
    $region7: #{build_network_forward.1} parent=1 // pred_check_branch
      %17 = sbr.rel (0) target = $region9
    $region8: #{build_network_forward.1} parent=1 // pred_region
      %s19 = ssub.s32 512, 512
      %20 = vsyncadd [#allocation3], %s19
      %s21 = sshll.u32 [#allocation2], 4
      %s22 = int_to_ptr.vmem [resolvable:$true] %s21
      %27 = dma.hbm_to_vmem [thread:$0]  %s1, 512, %s22, [#allocation3], 128, 128, 8
    $region9: #{build_network_forward.1} parent=1 // pred_fallthru
      _
    // Predicated region
    $region10: #{build_network_forward.1} parent=1 // pred_check
      _
    $region11: #{build_network_forward.1} parent=1 // pred_check_branch
      %29 = sbr.rel (0) target = $region13
    $region12: #{build_network_forward.1} parent=1 // pred_region
      _
    $region13: #{build_network_forward.1} parent=1 // pred_fallthru
      _
    // Predicated region
    $region14: #{build_network_forward.1} parent=1 // pred_check
      _
    $region15: #{build_network_forward.1} parent=1 // pred_check_branch
      %31 = sbr.rel (0) target = $region17
    $region16: #{build_network_forward.1} parent=1 // pred_region
      _
    $region17: #{build_network_forward.1} parent=1 // pred_fallthru
      _
    // Predicated region
    $region18: #{build_network_forward.1} parent=1 // pred_check
      _
    $region19: #{build_network_forward.1} parent=1 // pred_check_branch
      %33 = sbr.rel (0) target = $region21
    $region20: #{build_network_forward.1} parent=1 // pred_region
      _
    $region21: #{build_network_forward.1} parent=1 // pred_fallthru
      _
    // Predicated region
    $region22: #{build_network_forward.1} parent=1 // pred_check
      _
    $region23: #{build_network_forward.1} parent=1 // pred_check_branch
      %35 = sbr.rel (0) target = $region25
    $region24: #{build_network_forward.1} parent=1 // pred_region
      _
    $region25: #{build_network_forward.1} parent=1 // pred_fallthru
      _
    // Predicated region
    $region26: #{build_network_forward.1} parent=1 // pred_check
      _
    $region27: #{build_network_forward.1} parent=1 // pred_check_branch
      %37 = sbr.rel (0) target = $region29
    $region28: #{build_network_forward.1} parent=1 // pred_region
      _
    $region29: #{build_network_forward.1} parent=1 // pred_fallthru
      _
    // Predicated region
    $region30: #{build_network_forward.1} parent=1 // pred_check
      _
    $region31: #{build_network_forward.1} parent=1 // pred_check_branch
      %39 = sbr.rel (0) target = $region33
    $region32: #{build_network_forward.1} parent=1 // pred_region
      %40 = dma.done [#allocation3], 512
    $region33: #{build_network_forward.1} parent=1 // pred_fallthru
      _
    %v41 = vld [vmem:[#allocation2] sm:$0xff]
    %v42 = vld [vmem:[#allocation2 + $0x8] sm:$0xff]
    %v43 = vld [vmem:[#allocation2 + $0x10] sm:$0xff]
    %v44 = vld [vmem:[#allocation2 + $0x18] sm:$0xff]
    %v45 = vld [vmem:[%s3] sm:$0xff]
    %v46 = vld [vmem:[%s3 + $0x8] sm:$0xff]
    %v47 = vld [vmem:[%s3 + $0x10] sm:$0xff]
    %v48 = vld [vmem:[%s3 + $0x18] sm:$0xff]
    %v49 = vld [vmem:[%s3 + $0x20] sm:$0xff]
    %v50 = vld [vmem:[%s3 + $0x28] sm:$0xff]
    %v51 = vld [vmem:[%s3 + $0x30] sm:$0xff]
    %v52 = vld [vmem:[%s3 + $0x38] sm:$0xff]
    %v53 = vld [vmem:[%s5] sm:$0xff]
    %v54 = vld [vmem:[%s5 + $0x8] sm:$0xff]
    %v55 = vld [vmem:[%s5 + $0x10] sm:$0xff]
    %v56 = vld [vmem:[%s5 + $0x18] sm:$0xff]
    %v57 = vld [vmem:[%s5 + $0x20] sm:$0xff]
    %v58 = vld [vmem:[%s5 + $0x28] sm:$0xff]
    %v59 = vld [vmem:[%s5 + $0x30] sm:$0xff]
    %v60 = vld [vmem:[%s5 + $0x38] sm:$0xff]
    %v61 = vld [vmem:[%s0] sm:$0xff]
    %v62 = vld [vmem:[%s2] sm:$0x1]
    %v64 = vlaneseq
    %v65 = vshrl.u32 %v64, 7
    %v66 = vsub.s32 0, %v65
    %v67 = vrot.slane %v62, %v66
    %vm69 = vcmask 261120
    %v71 = vsel %vm69, %v61, 0
    %73 = vmatprep.subr.mxu0 0.0
    %74 = vmatpush1.msra.mxu0 %v41
    %75 = vmatprep.subr.mxu0 0.0
    %76 = vmatpush1.msra.mxu0 %v42
    %77 = vmatprep.subr.mxu0 0.0
    %78 = vmatpush1.msra.mxu0 %v43
    %79 = vmatprep.subr.mxu0 0.0
    %80 = vmatpush1.msra.mxu0 %v44
    %81 = vmatprep.subr.mxu0 0.0
    %82 = vmatpush1.msra.mxu0 0.0
    %83 = vmatprep.subr.mxu0 0.0
    %84 = vmatpush1.msra.mxu0 0.0
    %85 = vmatprep.subr.mxu0 0.0
    %86 = vmatpush1.msra.mxu0 0.0
    %87 = vmatprep.subr.mxu0 0.0
    %88 = vmatpush1.msra.mxu0 0.0
    %89 = vmatprep.subr.mxu0 0.0
    %90 = vmatpush1.msra.mxu0 0.0
    %91 = vmatprep.subr.mxu0 0.0
    %92 = vmatpush1.msra.mxu0 0.0
    %93 = vmatprep.subr.mxu0 0.0
    %94 = vmatpush1.msra.mxu0 0.0
    %95 = vmatprep.subr.mxu0 0.0
    %96 = vmatpush1.msra.mxu0 0.0
    %97 = vmatprep.subr.mxu0 0.0
    %98 = vmatpush1.msra.mxu0 0.0
    %99 = vmatprep.subr.mxu0 0.0
    %100 = vmatpush1.msra.mxu0 0.0
    %101 = vmatprep.subr.mxu0 0.0
    %102 = vmatpush1.msra.mxu0 0.0
    %103 = vmatprep.subr.mxu0 0.0
    %104 = vmatpush1.msra.mxu0 0.0
    %105 = vmatprep.subr.mxu0 0.0
    %106 = vmatpush1.msra.mxu0 0.0
    %107 = vmatprep.subr.mxu0 0.0
    %108 = vmatpush1.msra.mxu0 0.0
    %109 = vmatprep.subr.mxu0 0.0
    %110 = vmatpush1.msra.mxu0 0.0
    %111 = vmatprep.subr.mxu0 0.0
    %112 = vmatpush1.msra.mxu0 0.0
    %113 = vmatprep.subr.mxu0 0.0
    %114 = vmatpush1.msra.mxu0 0.0
    %115 = vmatprep.subr.mxu0 0.0
    %116 = vmatpush1.msra.mxu0 0.0
    %117 = vmatprep.subr.mxu0 0.0
    %118 = vmatpush1.msra.mxu0 0.0
    %119 = vmatprep.subr.mxu0 0.0
    %120 = vmatpush1.msra.mxu0 0.0
    %121 = vmatprep.subr.mxu0 0.0
    %122 = vmatpush1.msra.mxu0 0.0
    %123 = vmatprep.subr.mxu0 0.0
    %124 = vmatpush1.msra.mxu0 0.0
    %125 = vmatprep.subr.mxu0 0.0
    %126 = vmatpush1.msra.mxu0 0.0
    %127 = vmatprep.subr.mxu0 0.0
    %128 = vmatpush1.msra.mxu0 0.0
    %129 = vmatprep.subr.mxu0 0.0
    %130 = vmatpush1.msra.mxu0 0.0
    %131 = vmatprep.subr.mxu0 0.0
    %132 = vmatpush1.msra.mxu0 0.0
    %133 = vmatprep.subr.mxu0 0.0
    %134 = vmatpush1.msra.mxu0 0.0
    %135 = vmatprep.subr.mxu0 0.0
    %136 = vmatpush1.msra.mxu0 0.0
    %137 = vmatprep.mubr.f32.mxu0 0.0
    %138 = vmatmul.mubr.f32.gmra.mrb[0].mxu0 %v71
    %v139 = vpop.f32.mrb[0].mxu0
    %v140 = vadd.f32 %v67, %v139
    %v141 = vpop.f32.mrb[0].mxu0
    %142 = vdwg.mxu0
    %v143 = vmax.f32 %v140, 0.0
    %v144 = vld [vmem:[%s4] sm:$0x1]
    %v146 = vlaneseq
    %v147 = vshrl.u32 %v146, 7
    %v148 = vsub.s32 0, %v147
    %v149 = vrot.slane %v144, %v148
    %vm151 = vcmask 523264
    %v153 = vsel %vm151, %v143, 0
    %155 = vmatprep.subr.mxu0 0.0
    %156 = vmatpush1.msra.mxu0 %v45
    %157 = vmatprep.subr.mxu0 0.0
    %158 = vmatpush1.msra.mxu0 %v46
    %159 = vmatprep.subr.mxu0 0.0
    %160 = vmatpush1.msra.mxu0 %v47
    %161 = vmatprep.subr.mxu0 0.0
    %162 = vmatpush1.msra.mxu0 %v48
    %163 = vmatprep.subr.mxu0 0.0
    %164 = vmatpush1.msra.mxu0 %v49
    %165 = vmatprep.subr.mxu0 0.0
    %166 = vmatpush1.msra.mxu0 %v50
    %167 = vmatprep.subr.mxu0 0.0
    %168 = vmatpush1.msra.mxu0 %v51
    %169 = vmatprep.subr.mxu0 0.0
    %170 = vmatpush1.msra.mxu0 %v52
    %171 = vmatprep.subr.mxu0 0.0
    %172 = vmatpush1.msra.mxu0 0.0
    %173 = vmatprep.subr.mxu0 0.0
    %174 = vmatpush1.msra.mxu0 0.0
    %175 = vmatprep.subr.mxu0 0.0
    %176 = vmatpush1.msra.mxu0 0.0
    %177 = vmatprep.subr.mxu0 0.0
    %178 = vmatpush1.msra.mxu0 0.0
    %179 = vmatprep.subr.mxu0 0.0
    %180 = vmatpush1.msra.mxu0 0.0
    %181 = vmatprep.subr.mxu0 0.0
    %182 = vmatpush1.msra.mxu0 0.0
    %183 = vmatprep.subr.mxu0 0.0
    %184 = vmatpush1.msra.mxu0 0.0
    %185 = vmatprep.subr.mxu0 0.0
    %186 = vmatpush1.msra.mxu0 0.0
    %187 = vmatprep.subr.mxu0 0.0
    %188 = vmatpush1.msra.mxu0 0.0
    %189 = vmatprep.subr.mxu0 0.0
    %190 = vmatpush1.msra.mxu0 0.0
    %191 = vmatprep.subr.mxu0 0.0
    %192 = vmatpush1.msra.mxu0 0.0
    %193 = vmatprep.subr.mxu0 0.0
    %194 = vmatpush1.msra.mxu0 0.0
    %195 = vmatprep.subr.mxu0 0.0
    %196 = vmatpush1.msra.mxu0 0.0
    %197 = vmatprep.subr.mxu0 0.0
    %198 = vmatpush1.msra.mxu0 0.0
    %199 = vmatprep.subr.mxu0 0.0
    %200 = vmatpush1.msra.mxu0 0.0
    %201 = vmatprep.subr.mxu0 0.0
    %202 = vmatpush1.msra.mxu0 0.0
    %203 = vmatprep.subr.mxu0 0.0
    %204 = vmatpush1.msra.mxu0 0.0
    %205 = vmatprep.subr.mxu0 0.0
    %206 = vmatpush1.msra.mxu0 0.0
    %207 = vmatprep.subr.mxu0 0.0
    %208 = vmatpush1.msra.mxu0 0.0
    %209 = vmatprep.subr.mxu0 0.0
    %210 = vmatpush1.msra.mxu0 0.0
    %211 = vmatprep.subr.mxu0 0.0
    %212 = vmatpush1.msra.mxu0 0.0
    %213 = vmatprep.subr.mxu0 0.0
    %214 = vmatpush1.msra.mxu0 0.0
    %215 = vmatprep.subr.mxu0 0.0
    %216 = vmatpush1.msra.mxu0 0.0
    %217 = vmatprep.subr.mxu0 0.0
    %218 = vmatpush1.msra.mxu0 0.0
    %219 = vmatprep.mubr.f32.mxu0 0.0
    %220 = vmatmul.mubr.f32.gmra.mrb[0].mxu0 %v153
    %v221 = vpop.f32.mrb[0].mxu0
    %v222 = vadd.f32 %v149, %v221
    %v223 = vpop.f32.mrb[0].mxu0
    %224 = vdwg.mxu0
    %v225 = vmax.f32 %v222, -1000.0
    %v226 = vmin.f32 %v225, 1000.0
    %v227 = vld [vmem:[%s6] sm:$0x1]
    %v229 = vlaneseq
    %v230 = vshrl.u32 %v229, 7
    %v231 = vsub.s32 0, %v230
    %v232 = vrot.slane %v227, %v231
    %v235 = vsel %vm151, %v226, 0
    %237 = vmatprep.subr.mxu0 0.0
    %238 = vmatpush1.msra.mxu0 %v53
    %239 = vmatprep.subr.mxu0 0.0
    %240 = vmatpush1.msra.mxu0 %v54
    %241 = vmatprep.subr.mxu0 0.0
    %242 = vmatpush1.msra.mxu0 %v55
    %243 = vmatprep.subr.mxu0 0.0
    %244 = vmatpush1.msra.mxu0 %v56
    %245 = vmatprep.subr.mxu0 0.0
    %246 = vmatpush1.msra.mxu0 %v57
    %247 = vmatprep.subr.mxu0 0.0
    %248 = vmatpush1.msra.mxu0 %v58
    %249 = vmatprep.subr.mxu0 0.0
    %250 = vmatpush1.msra.mxu0 %v59
    %251 = vmatprep.subr.mxu0 0.0
    %252 = vmatpush1.msra.mxu0 %v60
    %253 = vmatprep.subr.mxu0 0.0
    %254 = vmatpush1.msra.mxu0 0.0
    %255 = vmatprep.subr.mxu0 0.0
    %256 = vmatpush1.msra.mxu0 0.0
    %257 = vmatprep.subr.mxu0 0.0
    %258 = vmatpush1.msra.mxu0 0.0
    %259 = vmatprep.subr.mxu0 0.0
    %260 = vmatpush1.msra.mxu0 0.0
    %261 = vmatprep.subr.mxu0 0.0
    %262 = vmatpush1.msra.mxu0 0.0
    %263 = vmatprep.subr.mxu0 0.0
    %264 = vmatpush1.msra.mxu0 0.0
    %265 = vmatprep.subr.mxu0 0.0
    %266 = vmatpush1.msra.mxu0 0.0
    %267 = vmatprep.subr.mxu0 0.0
    %268 = vmatpush1.msra.mxu0 0.0
    %269 = vmatprep.subr.mxu0 0.0
    %270 = vmatpush1.msra.mxu0 0.0
    %271 = vmatprep.subr.mxu0 0.0
    %272 = vmatpush1.msra.mxu0 0.0
    %273 = vmatprep.subr.mxu0 0.0
    %274 = vmatpush1.msra.mxu0 0.0
    %275 = vmatprep.subr.mxu0 0.0
    %276 = vmatpush1.msra.mxu0 0.0
    %277 = vmatprep.subr.mxu0 0.0
    %278 = vmatpush1.msra.mxu0 0.0
    %279 = vmatprep.subr.mxu0 0.0
    %280 = vmatpush1.msra.mxu0 0.0
    %281 = vmatprep.subr.mxu0 0.0
    %282 = vmatpush1.msra.mxu0 0.0
    %283 = vmatprep.subr.mxu0 0.0
    %284 = vmatpush1.msra.mxu0 0.0
    %285 = vmatprep.subr.mxu0 0.0
    %286 = vmatpush1.msra.mxu0 0.0
    %287 = vmatprep.subr.mxu0 0.0
    %288 = vmatpush1.msra.mxu0 0.0
    %289 = vmatprep.subr.mxu0 0.0
    %290 = vmatpush1.msra.mxu0 0.0
    %291 = vmatprep.subr.mxu0 0.0
    %292 = vmatpush1.msra.mxu0 0.0
    %293 = vmatprep.subr.mxu0 0.0
    %294 = vmatpush1.msra.mxu0 0.0
    %295 = vmatprep.subr.mxu0 0.0
    %296 = vmatpush1.msra.mxu0 0.0
    %297 = vmatprep.subr.mxu0 0.0
    %298 = vmatpush1.msra.mxu0 0.0
    %299 = vmatprep.subr.mxu0 0.0
    %300 = vmatpush1.msra.mxu0 0.0
    %301 = vmatprep.mubr.f32.mxu0 0.0
    %302 = vmatmul.mubr.f32.gmra.mrb[0].mxu0 %v235
    %v303 = vpop.f32.mrb[0].mxu0
    %v304 = vadd.f32 %v232, %v303
    %v305 = vpop.f32.mrb[0].mxu0
    %306 = vdwg.mxu0
    %vm307 = vcmask 130048
    %v308 = vsel %vm307, %v304, -inf
    %309 = vmax.xlane.f32.xlu0 %v308
    %v310 = vpop.xlane.xlu0 %309
    %v311 = vsub.f32 %v304, %v310
    %v312 = vmul.f32 %v311, 1.442695
    %v313 = vpow.pop %v312
    %v314 = vsel %vm307, %v313, 0.0
    %315 = vadd.xlane.f32.xlu0 %v314
    %v316 = vpop.xlane.xlu0 %315
    %v317 = vlog2.pop %v316
    %v318 = vmul.f32 %v317, 0.6931472
    %v319 = vsub.f32 %v311, %v318
    %320 = vst.msk [vmem:[#allocation5] sm:$0xff] %vm307, %v319
    // Predicated region
    $region34: #{build_network_forward.1} parent=1 // pred_check
      _
    $region35: #{build_network_forward.1} parent=1 // pred_check_branch
      %322 = sbr.rel (0) target = $region37
    $region36: #{build_network_forward.1} parent=1 // pred_region
      %s324 = ssub.s32 128, 128
      %325 = vsyncadd [#allocation4], %s324
      %s327 = sshll.u32 [#allocation5], 4
      %s328 = int_to_ptr.vmem [resolvable:$true] %s327
      %330 = dma.vmem_to_hbm [thread:$0]  %s328, 128, %s7, [#allocation4]
    $region37: #{build_network_forward.1} parent=1 // pred_fallthru
      _
    // Predicated region
    $region38: #{build_network_forward.1} parent=1 // pred_check
      _
    $region39: #{build_network_forward.1} parent=1 // pred_check_branch
      %332 = sbr.rel (0) target = $region41
    $region40: #{build_network_forward.1} parent=1 // pred_region
      %333 = dma.done [#allocation4], 128
    $region41: #{build_network_forward.1} parent=1 // pred_fallthru
      _
    %334 = vsyncpa [#allocation3], 1
    %335 = vsyncpa [#allocation4], 1

</llo_original>
